<compile_context>
chip_gen: v7x
topology: tpu7x:2x2x1
jax: 0.10.0
libtpu: 0.0.40
codegen_flags: <defaults>
</compile_context>

<pallas_src>
import jax
import jax.numpy as jnp
from jax.experimental import pallas as pl
from jax.experimental.pallas import tpu as pltpu


def _round_up(x: int, m: int) -> int:
    return ((x + m - 1) // m) * m


def _make_diag_ce_kernel(n_valid: int, tile_m: int, diag_in_tile: bool):
    """Builds a kernel computing sum over a row-tile of (logsumexp(row) - row[diag])."""

    def _write_partial(o_ref, partial):
        # Lane-dense (1, 8, 128) output tile; partial goes to [0, 0, 0], rest 0.
        r = jax.lax.broadcasted_iota(jnp.int32, (1, 8, 128), 1)
        c = jax.lax.broadcasted_iota(jnp.int32, (1, 8, 128), 2)
        o_ref[...] = jnp.where((r == 0) & (c == 0), partial, 0.0)

    def _row_lse(x):
        row_max = jnp.max(x, axis=-1, keepdims=True)
        return jnp.log(jnp.sum(jnp.exp(x - row_max), axis=-1, keepdims=True)) + row_max

    if diag_in_tile:
        # Diagonal (TM, TM) sub-block arrives as a second BlockSpec operand.
        def kernel(x_ref, d_ref, o_ref):
            x = x_ref[...].astype(jnp.float32)                 # (TM, N)
            lse = _row_lse(x)                                  # (TM, 1)
            xd = d_ref[...].astype(jnp.float32)                # (TM, TM)
            r_ids = jax.lax.broadcasted_iota(jnp.int32, xd.shape, 0)
            c_ids = jax.lax.broadcasted_iota(jnp.int32, xd.shape, 1)
            diag = jnp.sum(jnp.where(r_ids == c_ids, xd, 0.0), axis=-1, keepdims=True)
            _write_partial(o_ref, jnp.sum(lse - diag))
    else:
        def kernel(x_ref, o_ref):
            i = pl.program_id(0)
            x = x_ref[...].astype(jnp.float32)                 # (TM, NC)
            tm, nc = x.shape
            lse = _row_lse(x)                                  # (TM, 1)
            col_ids = jax.lax.broadcasted_iota(jnp.int32, (tm, nc), 1)
            row_ids = i * tile_m + jax.lax.broadcasted_iota(jnp.int32, (tm, nc), 0)
            diag = jnp.sum(jnp.where(col_ids == row_ids, x, 0.0), axis=-1, keepdims=True)
            nce = lse - diag                                   # (TM, 1)
            rows = i * tile_m + jax.lax.broadcasted_iota(jnp.int32, (tm, 1), 0)
            _write_partial(o_ref, jnp.sum(jnp.where(rows < n_valid, nce, 0.0)))

    return kernel


def _diag_softmax_nll_mean(logits: jax.Array) -> jax.Array:
    """mean_i( -log_softmax(logits, axis=-1)[i, i] ) via a row-tiled Pallas TPU kernel."""
    n, m = logits.shape
    if n != m:
        raise ValueError("expected a square logits/similarity matrix")

    itemsize = jnp.dtype(logits.dtype).itemsize
    # One input block <= 4 MiB => double-buffered stream stays well inside
    # v5e's 16 MiB default scoped VMEM and v7x's 64 MiB physical VMEM.
    max_tm = 256
    while max_tm > 8 and max_tm * n * itemsize > 4 * 1024 * 1024:
        max_tm //= 2

    tile_m = None
    for cand in (256, 128, 64, 32, 16, 8):
        if cand <= max_tm and cand <= n and n % cand == 0:
            tile_m = cand
            break

    if tile_m is not None:
        x = logits
        n_rows = n
        # Fetch the diagonal sub-block via BlockSpec only when it is 128-lane aligned.
        diag_in_tile = tile_m % 128 == 0
    else:
        # No clean divisor: pad rows only (padded rows are masked inside the kernel).
        tile_m = min(max_tm, _round_up(n, 8))
        n_rows = _round_up(n, tile_m)
        x = jnp.pad(logits, ((0, n_rows - n), (0, 0)))
        diag_in_tile = False

    g = n_rows // tile_m
    kernel = _make_diag_ce_kernel(n, tile_m, diag_in_tile)

    in_specs = [pl.BlockSpec((tile_m, n), lambda i: (i, 0))]                 # row stream
    operands = [x]
    if diag_in_tile:
        in_specs.append(pl.BlockSpec((tile_m, tile_m), lambda i: (i, i)))    # diag block
        operands.append(x)

    bytes_accessed = n_rows * n * itemsize + g * 8 * 128 * 4
    if diag_in_tile:
        bytes_accessed += g * tile_m * tile_m * itemsize

    partials = pl.pallas_call(
        kernel,
        out_shape=jax.ShapeDtypeStruct((g, 8, 128), jnp.float32),
        grid_spec=pltpu.PrefetchScalarGridSpec(
            num_scalar_prefetch=0,
            grid=(g,),
            in_specs=in_specs,
            out_specs=pl.BlockSpec((1, 8, 128), lambda i: (i, 0, 0)),
        ),
        compiler_params=pltpu.CompilerParams(
            dimension_semantics=("parallel",),   # independent partials -> 2 TCs on v7x
            vmem_limit_bytes=32 * 1024 * 1024,
        ),
        cost_estimate=pl.CostEstimate(
            flops=6 * n_rows * n,
            transcendentals=n_rows * n,
            bytes_accessed=bytes_accessed,
        ),
    )(*operands)

    return jnp.sum(partials) / jnp.float32(n)


def poincare_dist_matrix(x: jax.Array, y: jax.Array, c: float = 1.0,
                         eps: float = 1e-7) -> jax.Array:
    # TODO(synk): `pm.dist_matrix` is an unspecified external dependency in the original
    # module; assumed to be the standard Poincare-ball pairwise distance (curvature c),
    # implemented here in plain JAX (matmul + elementwise fuse well under XLA).
    x = x.astype(jnp.float32)
    y = y.astype(jnp.float32)
    x2 = jnp.sum(x * x, axis=-1, keepdims=True)             # (N, 1)
    y2 = jnp.sum(y * y, axis=-1, keepdims=True)             # (M, 1)
    sq = jnp.maximum(x2 + y2.T - 2.0 * (x @ y.T), 0.0)      # ||x_i - y_j||^2
    denom = jnp.maximum((1.0 - c * x2) * (1.0 - c * y2.T), eps)
    arg = jnp.maximum(1.0 + 2.0 * c * sq / denom, 1.0)
    return jnp.arccosh(arg) / jnp.sqrt(jnp.float32(c))


def binary_tree_loss(parent: jax.Array, child: jax.Array, c: float = 1.0) -> jax.Array:
    """Pallas TPU forward of BinaryTreeLoss.forward(parent, child)."""
    dis = poincare_dist_matrix(child, parent, c)
    return _diag_softmax_nll_mean(-dis)


def binary_tree_loss_ref(parent: jax.Array, child: jax.Array, c: float = 1.0) -> jax.Array:
    """Pure-JAX reference for validation."""
    dis = poincare_dist_matrix(child, parent, c)
    logpt = jax.nn.log_softmax(-dis, axis=-1)
    return jnp.mean(-jnp.diag(logpt))


if __name__ == "__main__":
    key = jax.random.PRNGKey(0)
    n, d = 8, 32                                   # 8 parent/child pairs, hidden dim 32
    kp, kc = jax.random.split(key)

    def _to_ball(v, radius=0.8):                   # keep points strictly inside the ball
        nrm = jnp.linalg.norm(v, axis=-1, keepdims=True)
        return v * (radius / jnp.maximum(nrm, radius))

    parent = _to_ball(0.5 * jax.random.normal(kp, (n, d), jnp.float32))
    child = _to_ball(0.5 * jax.random.normal(kc, (n, d), jnp.float32))

    loss = binary_tree_loss(parent, child, c=1.0)
    jax.block_until_ready(loss)

    ref = binary_tree_loss_ref(parent, child, c=1.0)
    assert jnp.allclose(loss, ref, atol=1e-5, rtol=1e-5), (loss, ref)

    # Exercise the tiled code paths of the core kernel:
    #   48 -> multi-tile (TM=16) full-row diag; 20 -> row padding + masking;
    #   384 -> multi-tile (TM=128) with the (TM, TM) diag BlockSpec operand.
    for n_extra in (48, 20, 384):
        sim = jax.random.normal(jax.random.PRNGKey(n_extra), (n_extra, n_extra), jnp.float32)
        got = _diag_softmax_nll_mean(sim)
        want = jnp.mean(-jnp.diag(jax.nn.log_softmax(sim, axis=-1)))
        assert jnp.allclose(got, want, atol=1e-4, rtol=1e-4), (n_extra, got, want)

    print("KERNEL_OK")
</pallas_src>

<mosaic_0001>
module attributes {stable_mosaic.version = 11 : i64} {
  func.func @kernel(%arg0: i32, %arg1: memref<8x8xf32, #tpu.memory_space<vmem>>, %arg2: memref<1x8x128xf32, #tpu.memory_space<vmem>>) attributes {dimension_semantics = [#tpu.dimension_semantics<parallel>], iteration_bounds = array<i64: 1>, scalar_prefetch = 0 : i64, scratch_operands = 0 : i64, tpu.core_type = #tpu.core_type<tc>, window_params = [{transform_indices = @transform_0, window_bounds = array<i64: 8, 8>}, {transform_indices = @transform_1, window_bounds = array<i64: 1, 8, 128>}]} {
    %c0 = arith.constant 0 : index
    %c0_0 = arith.constant 0 : index
    %0 = vector.load %arg1[%c0, %c0_0] : memref<8x8xf32, #tpu.memory_space<vmem>>, vector<8x8xf32>
    %cst = arith.constant dense<0xFF800000> : vector<8xf32>
    %1 = vector.multi_reduction <maximumf>, %0, %cst [1] : vector<8x8xf32> to vector<8xf32>
    %2 = vector.shape_cast %1 : vector<8xf32> to vector<8x1xf32>
    %3 = vector.broadcast %2 : vector<8x1xf32> to vector<8x8xf32>
    %4 = arith.subf %0, %3 : vector<8x8xf32>
    %5 = math.exp %4 : vector<8x8xf32>
    %cst_1 = arith.constant dense<0.000000e+00> : vector<8xf32>
    %6 = vector.multi_reduction <add>, %5, %cst_1 [1] : vector<8x8xf32> to vector<8xf32>
    %7 = vector.shape_cast %6 : vector<8xf32> to vector<8x1xf32>
    %8 = math.log %7 : vector<8x1xf32>
    %9 = arith.addf %8, %2 : vector<8x1xf32>
    %10 = tpu.iota {dimensions = array<i32: 1>} : vector<8x8xi32>
    %c8_i32 = arith.constant 8 : i32
    %11 = arith.muli %arg0, %c8_i32 : i32
    %12 = tpu.iota {dimensions = array<i32: 0>} : vector<8x8xi32>
    %13 = vector.broadcast %11 : i32 to vector<8x8xi32>
    %14 = arith.addi %13, %12 : vector<8x8xi32>
    %15 = arith.cmpi eq, %10, %14 : vector<8x8xi32>
    %cst_2 = arith.constant 0.000000e+00 : f32
    %16 = vector.broadcast %cst_2 : f32 to vector<8x8xf32>
    %17 = arith.select %15, %0, %16 : vector<8x8xi1>, vector<8x8xf32>
    %cst_3 = arith.constant dense<0.000000e+00> : vector<8xf32>
    %18 = vector.multi_reduction <add>, %17, %cst_3 [1] : vector<8x8xf32> to vector<8xf32>
    %19 = vector.shape_cast %18 : vector<8xf32> to vector<8x1xf32>
    %20 = arith.subf %9, %19 : vector<8x1xf32>
    %c8_i32_4 = arith.constant 8 : i32
    %21 = arith.muli %arg0, %c8_i32_4 : i32
    %22 = tpu.iota {dimensions = array<i32: 0>} : vector<8x1xi32>
    %23 = vector.broadcast %21 : i32 to vector<8x1xi32>
    %24 = arith.addi %23, %22 : vector<8x1xi32>
    %c8_i32_5 = arith.constant 8 : i32
    %25 = vector.broadcast %c8_i32_5 : i32 to vector<8x1xi32>
    %26 = arith.cmpi slt, %24, %25 : vector<8x1xi32>
    %cst_6 = arith.constant 0.000000e+00 : f32
    %27 = vector.broadcast %cst_6 : f32 to vector<8x1xf32>
    %28 = arith.select %26, %20, %27 : vector<8x1xi1>, vector<8x1xf32>
    %29 = vector.shape_cast %28 : vector<8x1xf32> to vector<1x8x1xf32>
    %cst_7 = arith.constant dense<0.000000e+00> : vector<1xf32>
    %30 = vector.multi_reduction <add>, %29, %cst_7 [1, 2] : vector<1x8x1xf32> to vector<1xf32>
    %31 = vector.shape_cast %30 : vector<1xf32> to vector<1x1x1xf32>
    %32 = vector.extract %31[0, 0, 0] : f32 from vector<1x1x1xf32>
    %33 = tpu.iota {dimensions = array<i32: 1>} : vector<1x8x128xi32>
    %34 = tpu.iota {dimensions = array<i32: 2>} : vector<1x8x128xi32>
    %c0_i32 = arith.constant 0 : i32
    %35 = vector.broadcast %c0_i32 : i32 to vector<1x8x128xi32>
    %36 = arith.cmpi eq, %33, %35 : vector<1x8x128xi32>
    %c0_i32_8 = arith.constant 0 : i32
    %37 = vector.broadcast %c0_i32_8 : i32 to vector<1x8x128xi32>
    %38 = arith.cmpi eq, %34, %37 : vector<1x8x128xi32>
    %39 = arith.andi %36, %38 : vector<1x8x128xi1>
    %cst_9 = arith.constant 0.000000e+00 : f32
    %40 = vector.broadcast %32 : f32 to vector<1x8x128xf32>
    %41 = vector.broadcast %cst_9 : f32 to vector<1x8x128xf32>
    %42 = arith.select %39, %40, %41 : vector<1x8x128xi1>, vector<1x8x128xf32>
    %c0_10 = arith.constant 0 : index
    %c0_11 = arith.constant 0 : index
    %c0_12 = arith.constant 0 : index
    %43 = vector.load %arg2[%c0_10, %c0_11, %c0_12] : memref<1x8x128xf32, #tpu.memory_space<vmem>>, vector<1x8x128xf32>
    tpu.vector_store %arg2[%c0_10, %c0_11, %c0_12], %42 {strides = array<i32>} : memref<1x8x128xf32, #tpu.memory_space<vmem>>, vector<1x8x128xf32>,
    return
  }
  func.func @transform_0(%arg0: i32) -> (i32, i32) {
    %c0_i32 = arith.constant 0 : i32
    %c0_i32_0 = arith.constant 0 : i32
    return %arg0, %c0_i32 : i32, i32
  }
  func.func @transform_1(%arg0: i32) -> (i32, i32, i32) {
    %c0_i32 = arith.constant 0 : i32
    %c0_i32_0 = arith.constant 0 : i32
    %c0_i32_1 = arith.constant 0 : i32
    return %arg0, %c0_i32, %c0_i32_0 : i32, i32, i32
  }
}

</mosaic_0001>

<llo_original>
// kernel: tpu_custom_call.1
$region0: #{tpu_custom_call.1}
  #allocation0 [shape = 'u32[]', space=smem, size = 0x4, offset = 0x4, fixed_abs, tag = 'smem constant byte address 0x4 - core index']
  #allocation1 [shape = 'u32[144,128]{1,0:T(1,128)}', space=vmem, size = 0x12000, scoped, tag = 'internal scratch']
  %s0 = inlined_call_operand.hbm [shape: f32[8,8], index: 0, kind: input, shape index: {}]
  %s1 = inlined_call_operand.hbm [shape: f32[1,8,128], index: 1, kind: output, shape index: {}]
  %s2 = sld [smem:[#allocation0]]
  $region18: #{tpu_custom_call.1} parent=0
    _
  %s4 = ssub.s32 1, %s2
  %s5 = scalar_select 0, %s4, %s2
  $region1: #{tpu_custom_call.1} parent=0
    #allocation2 [shape = 'u8[4096]{0}', space=vmem, size = 0x1000, scoped, tag = 'input window, operand 0, single buffered']
    #allocation3 [shape = 's32[1]{0}', space=sflag, size = 0x4, scoped, tag = 'scoped memory for tpu_custom_call.1']
    #allocation4 [shape = 's32[1]{0}', space=sflag, size = 0x4, scoped, tag = 'scoped memory for tpu_custom_call.1']
    #allocation5 [shape = 'u8[4096]{0}', space=vmem, size = 0x1000, scoped, tag = 'output window, operand 0, single buffered']
    %6 = vsyncpa [#allocation3], 0
    %7 = vsyncpa [#allocation4], 0
    // Predicated region
    $region2: #{tpu_custom_call.1} parent=1 // pred_check
      _
    $region3: #{tpu_custom_call.1} parent=1 // pred_check_branch
      %9 = sbr.rel (0) target = $region5
    $region4: #{tpu_custom_call.1} parent=1 // pred_region
      %s11 = ssub.s32 128, 128
      %12 = vsyncadd [#allocation3], %s11
      %s14 = sshll.u32 [#allocation2], 4
      %s15 = int_to_ptr.vmem [resolvable:$true] %s14
      %17 = dma.hbm_to_vmem [thread:$0]  %s0, 128, %s15, [#allocation3]
    $region5: #{tpu_custom_call.1} parent=1 // pred_fallthru
      _
    // Predicated region
    $region6: #{tpu_custom_call.1} parent=1 // pred_check
      _
    $region7: #{tpu_custom_call.1} parent=1 // pred_check_branch
      %19 = sbr.rel (0) target = $region9
    $region8: #{tpu_custom_call.1} parent=1 // pred_region
      %20 = dma.done [#allocation3], 128
    $region9: #{tpu_custom_call.1} parent=1 // pred_fallthru
      _
    %v21 = vld [vmem:[#allocation2] sm:$0xff]
    %vm22 = vcmask 64512
    %v23 = vsel %vm22, %v21, -inf
    %24 = vmax.xlane.f32.xlu0 %v23
    %v25 = vpop.xlane.xlu0 %24
    %v26 = vsub.f32 %v21, %v25
    %v27 = vmul.f32 %v26, 1.442695
    %v28 = vpow.pop %v27
    %v29 = vsel %vm22, %v28, 0.0
    %30 = vadd.xlane.f32.xlu0 %v29
    %v31 = vpop.xlane.xlu0 %30
    %v32 = vlog2.pop %v31
    %v33 = vmul.f32 %v32, 0.6931472
    %v34 = vadd.f32 %v33, %v25
    %v35 = vlaneseq
    %v36 = vand.u32 %v35, 127
    %s37 = smul.u32 0, 8
    %v38 = vlaneseq
    %v39 = vshrl.u32 %v38, 7
    %v40 = vstv %s37
    %v41 = vadd.s32 %v40, %v39
    %vm42 = vcmp.eq.s32.totalorder %v36, %v41
    %v43 = vsel %vm42, %v21, 0.0
    %v44 = vsel %vm22, %v43, 0.0
    %45 = vadd.xlane.f32.xlu0 %v44
    %v46 = vpop.xlane.xlu0 %45
    %v47 = vsub.f32 %v34, %v46
    %vm48 = vcmp.lt.s32.totalorder %v41, 8
    %v49 = vsel %vm48, %v47, 0.0
    %vm50 = vcmask 7168
    %v51 = vsel %vm50, %v49, 0.0
    %52 = vadd.xlane.f32.xlu0 %v51
    %v53 = vpop.xlane.xlu0 %52
    %v54 = vrot.slane %v53, 4
    %v55 = vadd.f32 %v53, %v54
    %v56 = vrot.slane %v55, 2
    %v57 = vadd.f32 %v55, %v56
    %v58 = vrot.slane %v57, 1
    %v59 = vadd.f32 %v57, %v58
    %s60 = vtos %v59
    %vm61 = vcmp.eq.s32.totalorder %v39, 0
    %vm62 = vcmp.eq.s32.totalorder %v36, 0
    %vm63 = vmand %vm61, %vm62
    %v64 = vstv %s60
    %v65 = vsel %vm63, %v64, 0.0
    %66 = vst [vmem:[#allocation5] sm:$0xff] %v65
    // Predicated region
    $region10: #{tpu_custom_call.1} parent=1 // pred_check
      _
    $region11: #{tpu_custom_call.1} parent=1 // pred_check_branch
      %68 = sbr.rel (0) target = $region13
    $region12: #{tpu_custom_call.1} parent=1 // pred_region
      %s70 = ssub.s32 128, 128
      %71 = vsyncadd [#allocation4], %s70
      %s73 = sshll.u32 [#allocation5], 4
      %s74 = int_to_ptr.vmem [resolvable:$true] %s73
      %76 = dma.vmem_to_hbm [thread:$0]  %s74, 128, %s1, [#allocation4]
    $region13: #{tpu_custom_call.1} parent=1 // pred_fallthru
      _
    // Predicated region
    $region14: #{tpu_custom_call.1} parent=1 // pred_check
      _
    $region15: #{tpu_custom_call.1} parent=1 // pred_check_branch
      %78 = sbr.rel (0) target = $region17
    $region16: #{tpu_custom_call.1} parent=1 // pred_region
      %79 = dma.done [#allocation4], 128
    $region17: #{tpu_custom_call.1} parent=1 // pred_fallthru
      _
    %80 = vsyncpa [#allocation3], 1
    %81 = vsyncpa [#allocation4], 1

</llo_original>
